<compile_context>
chip_gen: v7x
topology: tpu7x:2x2x1
jax: 0.10.0
libtpu: 0.0.40
codegen_flags: <defaults>
</compile_context>

<pallas_src>
import jax
import jax.numpy as jnp
from jax.experimental import pallas as pl
from jax.experimental.pallas import tpu as pltpu

_LANE = 512            # lane-dense last dim (multiple of 128)
_MAX_TILE_R = 1024     # rows/tile: 1024*512*4B = 2 MiB (f32) per tile
                       #  -> (2 in + 2 out) double buffers ~= 8 MiB, fits the
                       #     scoped-VMEM defaults of v5e/v6e/v7x with headroom.
_SMALL_BYTES = 64 * 1024   # below this a custom-call launch costs more than the copy


def _copy_kernel(x_ref, o_ref):
    # Pure identity: the whole forward of GetFromAnns is a passthrough.
    o_ref[...] = x_ref[...]


def _pallas_identity(x: jax.Array, *, force: bool = False) -> jax.Array:
    """Identity copy of `x` through a tiled, lane-dense Pallas TPU kernel.

    `force=True` skips the small-input bypass (used to exercise the kernel
    in tests even on tiny demo tensors).
    """
    orig_shape = x.shape
    dtype = x.dtype
    n = int(x.size)
    if n == 0:
        return x
    itemsize = x.dtype.itemsize
    if (not force) and n * itemsize < _SMALL_BYTES:
        # Tiny annotation tensors: the launch overhead dwarfs an HBM copy.
        return jnp.asarray(x)

    # Lane-dense 2D view: (rows, 512).  Pad the flat tail if needed so every
    # tile is full; padding is cropped after the kernel.
    flat = x.reshape(-1)
    rows = pl.cdiv(n, _LANE)
    if rows <= _MAX_TILE_R:
        tile_r = rows                       # single full-extent block
    else:
        tile_r = _MAX_TILE_R                # multiple of 8 -> legal block rows
        rows = pl.cdiv(rows, tile_r) * tile_r
    n_pad = rows * _LANE
    if n_pad != n:
        flat = jnp.pad(flat, (0, n_pad - n))
    flat2d = flat.reshape(rows, _LANE)
    grid = (rows // tile_r,)

    out = pl.pallas_call(
        _copy_kernel,
        out_shape=jax.ShapeDtypeStruct((rows, _LANE), dtype),
        grid_spec=pltpu.PrefetchScalarGridSpec(
            num_scalar_prefetch=0,
            grid=grid,
            in_specs=[pl.BlockSpec((tile_r, _LANE), lambda i: (i, 0))],
            out_specs=pl.BlockSpec((tile_r, _LANE), lambda i: (i, 0)),
        ),
        compiler_params=pltpu.CompilerParams(
            # Row tiles are independent -> shard across v7x's 2 TensorCores;
            # neutral on single-TC v5e/v6e.
            dimension_semantics=("parallel",),
        ),
        cost_estimate=pl.CostEstimate(
            flops=0,
            transcendentals=0,
            bytes_accessed=2 * rows * _LANE * itemsize,
        ),
    )(flat2d)

    out_flat = out.reshape(-1)
    if n_pad != n:
        out_flat = out_flat[:n]
    return out_flat.reshape(orig_shape)


class GetFromAnns:
    """JAX/Pallas port of the PyTorch GetFromAnns module.

    Parameter-free passthrough: places `anns` into a dict keyed by the enabled
    flags.  Like the PyTorch original (which stores the same tensor object
    under each key), every requested key shares ONE array — zero extra HBM
    traffic.  Set `materialize_copy=True` to route the data through the Pallas
    copy kernel exactly once (still shared across all keys).
    """

    def __init__(self, category: bool = True, bounding_box: bool = False,
                 mask: bool = False, materialize_copy: bool = False):
        self.category = category
        self.bb = bounding_box
        self.mask = mask
        self.materialize_copy = materialize_copy
        self._out_dict = dict()

    def __call__(self, anns: jax.Array) -> dict:
        out = dict()
        if not (self.category or self.mask or self.bb):
            self._out_dict = out
            return out
        # At most ONE copy (or none): JAX arrays are immutable, so sharing the
        # reference is semantically identical to the PyTorch module.
        shared = _pallas_identity(anns) if self.materialize_copy else anns
        if self.category:
            out["category"] = shared
        if self.mask:
            out["mask"] = shared
        if self.bb:
            out["bb"] = shared
        self._out_dict = out
        return out


if __name__ == "__main__":
    key = jax.random.PRNGKey(0)
    # Small synthetic "annotations" tensor; layout: [B, C, H, W] (NCHW).
    anns = jax.random.normal(key, (2, 4, 16, 16), dtype=jnp.float32)

    # 1) Default module semantics: all keys share the input array (0 copies),
    #    exactly like the PyTorch reference.
    module = GetFromAnns(category=True, bounding_box=True, mask=True)
    out = module(anns)
    assert set(out.keys()) == {"category", "mask", "bb"}
    for k, v in out.items():
        jax.block_until_ready(v)
        assert v.shape == anns.shape and v.dtype == anns.dtype
        assert bool(jnp.all(v == anns)), f"mismatch for key {k}"

    # 2) Exercise the Pallas copy kernel once on TPU (force past the
    #    small-input bypass) and verify it is a bit-exact identity.
    copied = _pallas_identity(anns, force=True)
    jax.block_until_ready(copied)
    assert copied.shape == anns.shape and copied.dtype == anns.dtype
    assert bool(jnp.all(copied == anns)), "Pallas identity copy mismatch"

    # 3) Materialized-copy mode: still at most one copy, shared by all keys.
    module_copy = GetFromAnns(category=True, bounding_box=True, mask=True,
                              materialize_copy=True)
    out2 = module_copy(anns)
    vals = list(out2.values())
    for v in vals:
        jax.block_until_ready(v)
        assert bool(jnp.all(v == anns))
    assert all(v is vals[0] for v in vals)  # single shared array

    print("KERNEL_OK")
</pallas_src>

<mosaic_0001>
module attributes {stable_mosaic.version = 11 : i64} {
  func.func @_copy_kernel(%arg0: i32, %arg1: memref<4x512xf32, #tpu.memory_space<vmem>>, %arg2: memref<4x512xf32, #tpu.memory_space<vmem>>) attributes {dimension_semantics = [#tpu.dimension_semantics<parallel>], iteration_bounds = array<i64: 1>, scalar_prefetch = 0 : i64, scratch_operands = 0 : i64, tpu.core_type = #tpu.core_type<tc>, window_params = [{transform_indices = @transform_0, window_bounds = array<i64: 4, 512>}, {transform_indices = @transform_1, window_bounds = array<i64: 4, 512>}]} {
    %c0 = arith.constant 0 : index
    %c0_0 = arith.constant 0 : index
    %0 = vector.load %arg1[%c0, %c0_0] : memref<4x512xf32, #tpu.memory_space<vmem>>, vector<4x512xf32>
    %c0_1 = arith.constant 0 : index
    %c0_2 = arith.constant 0 : index
    %1 = vector.load %arg2[%c0_1, %c0_2] : memref<4x512xf32, #tpu.memory_space<vmem>>, vector<4x512xf32>
    tpu.vector_store %arg2[%c0_1, %c0_2], %0 {strides = array<i32>} : memref<4x512xf32, #tpu.memory_space<vmem>>, vector<4x512xf32>,
    return
  }
  func.func @transform_0(%arg0: i32) -> (i32, i32) {
    %c0_i32 = arith.constant 0 : i32
    %c0_i32_0 = arith.constant 0 : i32
    return %arg0, %c0_i32 : i32, i32
  }
  func.func @transform_1(%arg0: i32) -> (i32, i32) {
    %c0_i32 = arith.constant 0 : i32
    %c0_i32_0 = arith.constant 0 : i32
    return %arg0, %c0_i32 : i32, i32
  }
}

</mosaic_0001>

<llo_original>
// kernel: tpu_custom_call.1
$region0: #{tpu_custom_call.1}
  #allocation0 [shape = 'u32[]', space=smem, size = 0x4, offset = 0x4, fixed_abs, tag = 'smem constant byte address 0x4 - core index']
  #allocation1 [shape = 'u32[144,128]{1,0:T(1,128)}', space=vmem, size = 0x12000, scoped, tag = 'internal scratch']
  %s0 = inlined_call_operand.hbm [shape: f32[4,512], index: 0, kind: input, shape index: {}]
  %s1 = inlined_call_operand.hbm [shape: f32[4,512], index: 1, kind: output, shape index: {}]
  %s2 = sld [smem:[#allocation0]]
  $region18: #{tpu_custom_call.1} parent=0
    _
  %s4 = ssub.s32 1, %s2
  %s5 = scalar_select 0, %s4, %s2
  $region1: #{tpu_custom_call.1} parent=0
    #allocation2 [shape = 'u8[8192]{0}', space=vmem, size = 0x2000, scoped, tag = 'input window, operand 0, single buffered']
    #allocation3 [shape = 's32[1]{0}', space=sflag, size = 0x4, scoped, tag = 'scoped memory for tpu_custom_call.1']
    #allocation4 [shape = 's32[1]{0}', space=sflag, size = 0x4, scoped, tag = 'scoped memory for tpu_custom_call.1']
    #allocation5 [shape = 'u8[8192]{0}', space=vmem, size = 0x2000, scoped, tag = 'output window, operand 0, single buffered']
    %6 = vsyncpa [#allocation3], 0
    %7 = vsyncpa [#allocation4], 0
    // Predicated region
    $region2: #{tpu_custom_call.1} parent=1 // pred_check
      _
    $region3: #{tpu_custom_call.1} parent=1 // pred_check_branch
      %9 = sbr.rel (0) target = $region5
    $region4: #{tpu_custom_call.1} parent=1 // pred_region
      %s11 = ssub.s32 256, 256
      %12 = vsyncadd [#allocation3], %s11
      %s14 = sshll.u32 [#allocation2], 4
      %s15 = int_to_ptr.vmem [resolvable:$true] %s14
      %17 = dma.hbm_to_vmem [thread:$0]  %s0, 256, %s15, [#allocation3]
    $region5: #{tpu_custom_call.1} parent=1 // pred_fallthru
      _
    // Predicated region
    $region6: #{tpu_custom_call.1} parent=1 // pred_check
      _
    $region7: #{tpu_custom_call.1} parent=1 // pred_check_branch
      %19 = sbr.rel (0) target = $region9
    $region8: #{tpu_custom_call.1} parent=1 // pred_region
      %20 = dma.done [#allocation3], 256
    $region9: #{tpu_custom_call.1} parent=1 // pred_fallthru
      _
    %v21 = vld [vmem:[#allocation2] sm:$0xff]
    %v22 = vld [vmem:[#allocation2 + $0x8] sm:$0xff]
    %23 = vst [vmem:[#allocation5] sm:$0xff] %v21
    %24 = vst [vmem:[#allocation5 + $0x8] sm:$0xff] %v22
    // Predicated region
    $region10: #{tpu_custom_call.1} parent=1 // pred_check
      _
    $region11: #{tpu_custom_call.1} parent=1 // pred_check_branch
      %26 = sbr.rel (0) target = $region13
    $region12: #{tpu_custom_call.1} parent=1 // pred_region
      %s28 = ssub.s32 256, 256
      %29 = vsyncadd [#allocation4], %s28
      %s31 = sshll.u32 [#allocation5], 4
      %s32 = int_to_ptr.vmem [resolvable:$true] %s31
      %34 = dma.vmem_to_hbm [thread:$0]  %s32, 256, %s1, [#allocation4]
    $region13: #{tpu_custom_call.1} parent=1 // pred_fallthru
      _
    // Predicated region
    $region14: #{tpu_custom_call.1} parent=1 // pred_check
      _
    $region15: #{tpu_custom_call.1} parent=1 // pred_check_branch
      %36 = sbr.rel (0) target = $region17
    $region16: #{tpu_custom_call.1} parent=1 // pred_region
      %37 = dma.done [#allocation4], 256
    $region17: #{tpu_custom_call.1} parent=1 // pred_fallthru
      _
    %38 = vsyncpa [#allocation3], 1
    %39 = vsyncpa [#allocation4], 1

</llo_original>
